<compile_context>
chip_gen: v7x
topology: tpu7x:2x2x1
jax: 0.10.0
libtpu: 0.0.40
codegen_flags: <defaults>
</compile_context>

<pallas_src>
import functools

import jax
import jax.numpy as jnp
from jax.experimental import pallas as pl
from jax.experimental.pallas import tpu as pltpu


def _soft_f1_partials_kernel(pred_ref, tgt_ref, tp_out, sig_out, sm_out,
                             tp_acc, sig_acc, sm_acc,
                             *, valid_b, tile_b, need_mask, approx_recip):
    s = pl.program_id(0)            # batch slice (parallel axis, v7x megacore)
    t = pl.program_id(1)            # step within slice (reduction axis)
    nt = pl.num_programs(1)

    @pl.when(t == 0)
    def _():
        tp_acc[...] = jnp.zeros_like(tp_acc)
        sig_acc[...] = jnp.zeros_like(sig_acc)
        sm_acc[...] = jnp.zeros_like(sm_acc)

    pred = pred_ref[...].astype(jnp.float32)     # (C, TILE_B) logits
    tgt = tgt_ref[...].astype(jnp.float32)       # (C, TILE_B) targets

    # Softmax over the class axis: classes live on sublanes -> cheap reduction.
    m = jnp.max(pred, axis=0, keepdims=True)
    e = jnp.exp(pred - m)
    denom = jnp.sum(e, axis=0, keepdims=True)
    sm = e * pl.reciprocal(denom, approx=approx_recip)

    # Sigmoid of the ORIGINAL target (it plays the binary loss' "pred" role).
    sig = pl.reciprocal(1.0 + jnp.exp(-tgt), approx=approx_recip)

    if need_mask:
        # Mask out padded batch columns (they would otherwise contribute).
        col = (s * nt + t) * tile_b + jax.lax.broadcasted_iota(
            jnp.int32, pred.shape, 1)
        valid = col < valid_b
        sm = jnp.where(valid, sm, 0.0)
        sig = jnp.where(valid, sig, 0.0)

    # Elementwise accumulation only (VPU); cross-lane reduce deferred to finalize.
    tp_acc[...] += sm * sig
    sig_acc[...] += sig
    sm_acc[...] += sm

    @pl.when(t == nt - 1)
    def _():
        # One XLU cross-lane reduction per slice, written as (1, C, 1) partials.
        tp_out[0] = jnp.sum(tp_acc[...], axis=1, keepdims=True)
        sig_out[0] = jnp.sum(sig_acc[...], axis=1, keepdims=True)
        sm_out[0] = jnp.sum(sm_acc[...], axis=1, keepdims=True)


def _round_up(x, m):
    return ((x + m - 1) // m) * m


def soft_f1_loss_multi(pred: jax.Array, target: jax.Array, *,
                       batch_tile: int = 2048, num_slices: int = 2,
                       approx_recip: bool = True) -> jax.Array:
    """Pallas implementation of SoftF1LossMulti.forward. Returns shape (1,)."""
    B, C = pred.shape
    assert target.shape == (B, C)

    # Lane-dense layout: classes on sublanes, batch on the 128-lane axis.
    pred_t = pred.T          # (C, B)
    tgt_t = target.T         # (C, B)

    itemsize = jnp.dtype(pred.dtype).itemsize
    ns = max(1, int(num_slices))
    cols_per_slice = -(-B // ns)

    # Tile sizing: 2 inputs x 2 pipeline buffers x (C, tb) + 3 f32 accumulators
    # must fit a conservative VMEM budget (safe on v7x's 64 MiB as well).
    budget = 20 * 1024 * 1024
    bytes_per_col = C * (4 * itemsize + 3 * 4)
    tb = min(int(batch_tile), max(128, budget // bytes_per_col))
    tb = min(tb, _round_up(cols_per_slice, 128))
    tb = max(128, (tb // 128) * 128)

    steps = -(-cols_per_slice // tb)
    b_pad = ns * steps * tb
    need_mask = b_pad != B
    if need_mask:
        pad = b_pad - B
        pred_t = jnp.pad(pred_t, ((0, 0), (0, pad)))
        tgt_t = jnp.pad(tgt_t, ((0, 0), (0, pad)))

    vmem_need = 2 * 2 * C * tb * itemsize + 3 * C * tb * 4
    vmem_limit = 40 * 1024 * 1024 if vmem_need > 12 * 1024 * 1024 else None

    kernel = functools.partial(
        _soft_f1_partials_kernel,
        valid_b=B, tile_b=tb, need_mask=need_mask, approx_recip=approx_recip)

    def in_map(s, t):
        return (0, s * steps + t)

    def out_map(s, t):
        return (s, 0, 0)

    part_shape = jax.ShapeDtypeStruct((ns, C, 1), jnp.float32)
    tp_p, sig_p, sm_p = pl.pallas_call(
        kernel,
        out_shape=(part_shape, part_shape, part_shape),
        grid_spec=pltpu.PrefetchScalarGridSpec(
            num_scalar_prefetch=0,
            grid=(ns, steps),
            in_specs=[
                pl.BlockSpec((C, tb), in_map),
                pl.BlockSpec((C, tb), in_map),
            ],
            out_specs=(
                pl.BlockSpec((1, C, 1), out_map),
                pl.BlockSpec((1, C, 1), out_map),
                pl.BlockSpec((1, C, 1), out_map),
            ),
            scratch_shapes=[
                pltpu.VMEM((C, tb), jnp.float32),   # tp elementwise accumulator
                pltpu.VMEM((C, tb), jnp.float32),   # sum(sigmoid(target)) acc
                pltpu.VMEM((C, tb), jnp.float32),   # sum(softmax(pred)) acc
            ],
        ),
        compiler_params=pltpu.CompilerParams(
            dimension_semantics=("parallel", "arbitrary"),
            vmem_limit_bytes=vmem_limit,
        ),
    )(pred_t, tgt_t)

    # Tiny cross-slice combine + F1 in plain JAX (f32 throughout).
    tp = jnp.sum(tp_p[:, :, 0], axis=0)        # (C,)
    sig_sum = jnp.sum(sig_p[:, :, 0], axis=0)  # (C,)
    sm_sum = jnp.sum(sm_p[:, :, 0], axis=0)    # (C,)
    fp = sig_sum - tp                          # sum((1 - sm) * sig)
    fn = sm_sum - tp                           # sum(sm * (1 - sig))
    eps = 1e-16
    p = tp / (tp + fp + eps)
    r = tp / (tp + fn + eps)
    f1 = 2.0 * p * r / (p + r + eps)
    loss = jnp.sum(1.0 - f1) / C
    return loss.reshape(1).astype(pred.dtype)   # matches torch output shape (1,)


if __name__ == "__main__":
    key = jax.random.PRNGKey(0)
    k1, k2 = jax.random.split(key)
    B, C = 16, 4   # batch=16, num_classes=4

    pred = jax.random.normal(k1, (B, C), dtype=jnp.float32)
    labels = jax.random.randint(k2, (B,), 0, C)
    target = jax.nn.one_hot(labels, C, dtype=jnp.float32)

    # Pure-JAX reference mirroring the PyTorch module exactly.
    sm = jax.nn.softmax(pred, axis=1)
    ref = jnp.zeros((), jnp.float32)
    for i in range(C):
        pb = sm[:, i]                          # bin loss "target" = softmaxed pred slice
        sg = jax.nn.sigmoid(target[:, i])      # bin loss "pred"   = sigmoid(target slice)
        tp = jnp.sum(pb * sg)
        fp = jnp.sum((1 - pb) * sg)
        fn = jnp.sum(pb * (1 - sg))
        p = tp / (tp + fp + 1e-16)
        r = tp / (tp + fn + 1e-16)
        f1 = 2 * p * r / (p + r + 1e-16)
        ref = ref + (1 - f1)
    ref = ref / C

    # Exact-reciprocal path: tight check of the kernel semantics.
    loss_exact = soft_f1_loss_multi(pred, target, approx_recip=False)
    jax.block_until_ready(loss_exact)
    assert loss_exact.shape == (1,)
    assert jnp.allclose(loss_exact[0], ref, atol=1e-5, rtol=1e-5), (loss_exact, ref)

    # Fast path (EUP approximate reciprocal for softmax denom / sigmoid):
    # semantics already proven above, so only a loose sanity tolerance here.
    loss_fast = soft_f1_loss_multi(pred, target, approx_recip=True)
    jax.block_until_ready(loss_fast)
    assert loss_fast.shape == (1,)
    assert jnp.allclose(loss_fast[0], ref, atol=2e-2, rtol=2e-2), (loss_fast, ref)

    print("KERNEL_OK")
</pallas_src>

<mosaic_0001>
module attributes {stable_mosaic.version = 11 : i64} {
  func.func @_soft_f1_partials_kernel(%arg0: i32, %arg1: i32, %arg2: memref<4x128xf32, #tpu.memory_space<vmem>>, %arg3: memref<4x128xf32, #tpu.memory_space<vmem>>, %arg4: memref<1x4x1xf32, #tpu.memory_space<vmem>>, %arg5: memref<1x4x1xf32, #tpu.memory_space<vmem>>, %arg6: memref<1x4x1xf32, #tpu.memory_space<vmem>>, %arg7: memref<4x128xf32, #tpu.memory_space<vmem>>, %arg8: memref<4x128xf32, #tpu.memory_space<vmem>>, %arg9: memref<4x128xf32, #tpu.memory_space<vmem>>) attributes {dimension_semantics = [#tpu.dimension_semantics<parallel>, #tpu.dimension_semantics<arbitrary>], iteration_bounds = array<i64: 2, 1>, scalar_prefetch = 0 : i64, scratch_operands = 3 : i64, tpu.core_type = #tpu.core_type<tc>, window_params = [{transform_indices = @transform_0, window_bounds = array<i64: 4, 128>}, {transform_indices = @transform_1, window_bounds = array<i64: 4, 128>}, {transform_indices = @transform_2, window_bounds = array<i64: 1, 4, 1>}, {transform_indices = @transform_3, window_bounds = array<i64: 1, 4, 1>}, {transform_indices = @transform_4, window_bounds = array<i64: 1, 4, 1>}]} {
    %c0_i32 = arith.constant 0 : i32
    %0 = arith.cmpi eq, %arg1, %c0_i32 : i32
    %1 = arith.extui %0 : i1 to i32
    %c0_i32_0 = arith.constant 0 : i32
    %2 = arith.cmpi ne, %1, %c0_i32_0 : i32
    scf.if %2 {
      %cst_23 = arith.constant 0.000000e+00 : f32
      %46 = vector.broadcast %cst_23 : f32 to vector<4x128xf32>
      %c0_24 = arith.constant 0 : index
      %c0_25 = arith.constant 0 : index
      %47 = vector.load %arg7[%c0_24, %c0_25] : memref<4x128xf32, #tpu.memory_space<vmem>>, vector<4x128xf32>
      tpu.vector_store %arg7[%c0_24, %c0_25], %46 {strides = array<i32>} : memref<4x128xf32, #tpu.memory_space<vmem>>, vector<4x128xf32>,
      %cst_26 = arith.constant 0.000000e+00 : f32
      %48 = vector.broadcast %cst_26 : f32 to vector<4x128xf32>
      %c0_27 = arith.constant 0 : index
      %c0_28 = arith.constant 0 : index
      %49 = vector.load %arg8[%c0_27, %c0_28] : memref<4x128xf32, #tpu.memory_space<vmem>>, vector<4x128xf32>
      tpu.vector_store %arg8[%c0_27, %c0_28], %48 {strides = array<i32>} : memref<4x128xf32, #tpu.memory_space<vmem>>, vector<4x128xf32>,
      %cst_29 = arith.constant 0.000000e+00 : f32
      %50 = vector.broadcast %cst_29 : f32 to vector<4x128xf32>
      %c0_30 = arith.constant 0 : index
      %c0_31 = arith.constant 0 : index
      %51 = vector.load %arg9[%c0_30, %c0_31] : memref<4x128xf32, #tpu.memory_space<vmem>>, vector<4x128xf32>
      tpu.vector_store %arg9[%c0_30, %c0_31], %50 {strides = array<i32>} : memref<4x128xf32, #tpu.memory_space<vmem>>, vector<4x128xf32>,
    } else {
    }
    %c0 = arith.constant 0 : index
    %c0_1 = arith.constant 0 : index
    %3 = vector.load %arg2[%c0, %c0_1] : memref<4x128xf32, #tpu.memory_space<vmem>>, vector<4x128xf32>
    %c0_2 = arith.constant 0 : index
    %c0_3 = arith.constant 0 : index
    %4 = vector.load %arg3[%c0_2, %c0_3] : memref<4x128xf32, #tpu.memory_space<vmem>>, vector<4x128xf32>
    %cst = arith.constant dense<0xFF800000> : vector<128xf32>
    %5 = vector.multi_reduction <maximumf>, %3, %cst [0] : vector<4x128xf32> to vector<128xf32>
    %6 = vector.shape_cast %5 : vector<128xf32> to vector<1x128xf32>
    %7 = vector.broadcast %6 : vector<1x128xf32> to vector<4x128xf32>
    %8 = arith.subf %3, %7 : vector<4x128xf32>
    %9 = math.exp %8 : vector<4x128xf32>
    %cst_4 = arith.constant dense<0.000000e+00> : vector<128xf32>
    %10 = vector.multi_reduction <add>, %9, %cst_4 [0] : vector<4x128xf32> to vector<128xf32>
    %11 = vector.shape_cast %10 : vector<128xf32> to vector<1x128xf32>
    %12 = tpu.reciprocal %11 : vector<1x128xf32> -> vector<1x128xf32>
    %13 = vector.broadcast %12 : vector<1x128xf32> to vector<4x128xf32>
    %14 = arith.mulf %9, %13 : vector<4x128xf32>
    %cst_5 = arith.constant 0.000000e+00 : f32
    %15 = vector.broadcast %cst_5 : f32 to vector<4x128xf32>
    %16 = arith.subf %15, %4 : vector<4x128xf32>
    %17 = math.exp %16 : vector<4x128xf32>
    %cst_6 = arith.constant 1.000000e+00 : f32
    %18 = vector.broadcast %cst_6 : f32 to vector<4x128xf32>
    %19 = arith.addf %18, %17 : vector<4x128xf32>
    %20 = tpu.reciprocal %19 : vector<4x128xf32> -> vector<4x128xf32>
    %c1_i32 = arith.constant 1 : i32
    %21 = arith.muli %arg0, %c1_i32 : i32
    %22 = arith.addi %21, %arg1 : i32
    %c128_i32 = arith.constant 128 : i32
    %23 = arith.muli %22, %c128_i32 : i32
    %24 = tpu.iota {dimensions = array<i32: 1>} : vector<4x128xi32>
    %25 = vector.broadcast %23 : i32 to vector<4x128xi32>
    %26 = arith.addi %25, %24 : vector<4x128xi32>
    %c16_i32 = arith.constant 16 : i32
    %27 = vector.broadcast %c16_i32 : i32 to vector<4x128xi32>
    %28 = arith.cmpi slt, %26, %27 : vector<4x128xi32>
    %cst_7 = arith.constant 0.000000e+00 : f32
    %29 = vector.broadcast %cst_7 : f32 to vector<4x128xf32>
    %30 = arith.select %28, %14, %29 : vector<4x128xi1>, vector<4x128xf32>
    %cst_8 = arith.constant 0.000000e+00 : f32
    %31 = vector.broadcast %cst_8 : f32 to vector<4x128xf32>
    %32 = arith.select %28, %20, %31 : vector<4x128xi1>, vector<4x128xf32>
    %c0_9 = arith.constant 0 : index
    %c0_10 = arith.constant 0 : index
    %33 = vector.load %arg7[%c0_9, %c0_10] : memref<4x128xf32, #tpu.memory_space<vmem>>, vector<4x128xf32>
    %34 = arith.mulf %30, %32 : vector<4x128xf32>
    %35 = arith.addf %33, %34 : vector<4x128xf32>
    %c0_11 = arith.constant 0 : index
    %c0_12 = arith.constant 0 : index
    %36 = vector.load %arg7[%c0_11, %c0_12] : memref<4x128xf32, #tpu.memory_space<vmem>>, vector<4x128xf32>
    tpu.vector_store %arg7[%c0_11, %c0_12], %35 {strides = array<i32>} : memref<4x128xf32, #tpu.memory_space<vmem>>, vector<4x128xf32>,
    %c0_13 = arith.constant 0 : index
    %c0_14 = arith.constant 0 : index
    %37 = vector.load %arg8[%c0_13, %c0_14] : memref<4x128xf32, #tpu.memory_space<vmem>>, vector<4x128xf32>
    %38 = arith.addf %37, %32 : vector<4x128xf32>
    %c0_15 = arith.constant 0 : index
    %c0_16 = arith.constant 0 : index
    %39 = vector.load %arg8[%c0_15, %c0_16] : memref<4x128xf32, #tpu.memory_space<vmem>>, vector<4x128xf32>
    tpu.vector_store %arg8[%c0_15, %c0_16], %38 {strides = array<i32>} : memref<4x128xf32, #tpu.memory_space<vmem>>, vector<4x128xf32>,
    %c0_17 = arith.constant 0 : index
    %c0_18 = arith.constant 0 : index
    %40 = vector.load %arg9[%c0_17, %c0_18] : memref<4x128xf32, #tpu.memory_space<vmem>>, vector<4x128xf32>
    %41 = arith.addf %40, %30 : vector<4x128xf32>
    %c0_19 = arith.constant 0 : index
    %c0_20 = arith.constant 0 : index
    %42 = vector.load %arg9[%c0_19, %c0_20] : memref<4x128xf32, #tpu.memory_space<vmem>>, vector<4x128xf32>
    tpu.vector_store %arg9[%c0_19, %c0_20], %41 {strides = array<i32>} : memref<4x128xf32, #tpu.memory_space<vmem>>, vector<4x128xf32>,
    %c0_i32_21 = arith.constant 0 : i32
    %43 = arith.cmpi eq, %arg1, %c0_i32_21 : i32
    %44 = arith.extui %43 : i1 to i32
    %c0_i32_22 = arith.constant 0 : i32
    %45 = arith.cmpi ne, %44, %c0_i32_22 : i32
    scf.if %45 {
      %c0_23 = arith.constant 0 : index
      %c0_24 = arith.constant 0 : index
      %46 = vector.load %arg7[%c0_23, %c0_24] : memref<4x128xf32, #tpu.memory_space<vmem>>, vector<4x128xf32>
      %cst_25 = arith.constant dense<0.000000e+00> : vector<4xf32>
      %47 = vector.multi_reduction <add>, %46, %cst_25 [1] : vector<4x128xf32> to vector<4xf32>
      %48 = vector.shape_cast %47 : vector<4xf32> to vector<4x1xf32>
      %c0_26 = arith.constant 0 : index
      %c0_27 = arith.constant 0 : index
      %c0_28 = arith.constant 0 : index
      %49 = vector.load %arg4[%c0_26, %c0_27, %c0_28] : memref<1x4x1xf32, #tpu.memory_space<vmem>>, vector<1x4x1xf32>
      %50 = vector.shape_cast %49 : vector<1x4x1xf32> to vector<4x1xf32>
      %51 = vector.shape_cast %48 : vector<4x1xf32> to vector<1x4x1xf32>
      tpu.vector_store %arg4[%c0_26, %c0_27, %c0_28], %51 {strides = array<i32>} : memref<1x4x1xf32, #tpu.memory_space<vmem>>, vector<1x4x1xf32>,
      %c0_29 = arith.constant 0 : index
      %c0_30 = arith.constant 0 : index
      %52 = vector.load %arg8[%c0_29, %c0_30] : memref<4x128xf32, #tpu.memory_space<vmem>>, vector<4x128xf32>
      %cst_31 = arith.constant dense<0.000000e+00> : vector<4xf32>
      %53 = vector.multi_reduction <add>, %52, %cst_31 [1] : vector<4x128xf32> to vector<4xf32>
      %54 = vector.shape_cast %53 : vector<4xf32> to vector<4x1xf32>
      %c0_32 = arith.constant 0 : index
      %c0_33 = arith.constant 0 : index
      %c0_34 = arith.constant 0 : index
      %55 = vector.load %arg5[%c0_32, %c0_33, %c0_34] : memref<1x4x1xf32, #tpu.memory_space<vmem>>, vector<1x4x1xf32>
      %56 = vector.shape_cast %55 : vector<1x4x1xf32> to vector<4x1xf32>
      %57 = vector.shape_cast %54 : vector<4x1xf32> to vector<1x4x1xf32>
      tpu.vector_store %arg5[%c0_32, %c0_33, %c0_34], %57 {strides = array<i32>} : memref<1x4x1xf32, #tpu.memory_space<vmem>>, vector<1x4x1xf32>,
      %c0_35 = arith.constant 0 : index
      %c0_36 = arith.constant 0 : index
      %58 = vector.load %arg9[%c0_35, %c0_36] : memref<4x128xf32, #tpu.memory_space<vmem>>, vector<4x128xf32>
      %cst_37 = arith.constant dense<0.000000e+00> : vector<4xf32>
      %59 = vector.multi_reduction <add>, %58, %cst_37 [1] : vector<4x128xf32> to vector<4xf32>
      %60 = vector.shape_cast %59 : vector<4xf32> to vector<4x1xf32>
      %c0_38 = arith.constant 0 : index
      %c0_39 = arith.constant 0 : index
      %c0_40 = arith.constant 0 : index
      %61 = vector.load %arg6[%c0_38, %c0_39, %c0_40] : memref<1x4x1xf32, #tpu.memory_space<vmem>>, vector<1x4x1xf32>
      %62 = vector.shape_cast %61 : vector<1x4x1xf32> to vector<4x1xf32>
      %63 = vector.shape_cast %60 : vector<4x1xf32> to vector<1x4x1xf32>
      tpu.vector_store %arg6[%c0_38, %c0_39, %c0_40], %63 {strides = array<i32>} : memref<1x4x1xf32, #tpu.memory_space<vmem>>, vector<1x4x1xf32>,
    } else {
    }
    return
  }
  func.func @transform_0(%arg0: i32, %arg1: i32) -> (i32, i32) {
    %c1_i32 = arith.constant 1 : i32
    %0 = arith.muli %arg0, %c1_i32 : i32
    %1 = arith.addi %0, %arg1 : i32
    %c0_i32 = arith.constant 0 : i32
    %c0_i32_0 = arith.constant 0 : i32
    return %c0_i32, %1 : i32, i32
  }
  func.func @transform_1(%arg0: i32, %arg1: i32) -> (i32, i32) {
    %c1_i32 = arith.constant 1 : i32
    %0 = arith.muli %arg0, %c1_i32 : i32
    %1 = arith.addi %0, %arg1 : i32
    %c0_i32 = arith.constant 0 : i32
    %c0_i32_0 = arith.constant 0 : i32
    return %c0_i32, %1 : i32, i32
  }
  func.func @transform_2(%arg0: i32, %arg1: i32) -> (i32, i32, i32) {
    %c0_i32 = arith.constant 0 : i32
    %c0_i32_0 = arith.constant 0 : i32
    %c0_i32_1 = arith.constant 0 : i32
    return %arg0, %c0_i32, %c0_i32_0 : i32, i32, i32
  }
  func.func @transform_3(%arg0: i32, %arg1: i32) -> (i32, i32, i32) {
    %c0_i32 = arith.constant 0 : i32
    %c0_i32_0 = arith.constant 0 : i32
    %c0_i32_1 = arith.constant 0 : i32
    return %arg0, %c0_i32, %c0_i32_0 : i32, i32, i32
  }
  func.func @transform_4(%arg0: i32, %arg1: i32) -> (i32, i32, i32) {
    %c0_i32 = arith.constant 0 : i32
    %c0_i32_0 = arith.constant 0 : i32
    %c0_i32_1 = arith.constant 0 : i32
    return %arg0, %c0_i32, %c0_i32_0 : i32, i32, i32
  }
}

</mosaic_0001>

<llo_original>
// kernel: tpu_custom_call.1
$region0: #{tpu_custom_call.1}
  #allocation0 [shape = 'u32[]', space=smem, size = 0x4, offset = 0x4, fixed_abs, tag = 'smem constant byte address 0x4 - core index']
  #allocation1 [shape = 'u32[144,128]{1,0:T(1,128)}', space=vmem, size = 0x12000, scoped, tag = 'internal scratch']
  #allocation2 [shape = 'f32[4,128]{1,0:T(4,128)}', space=vmem, size = 0x800, scoped, tag = 'scratch operand']
  #allocation3 [shape = 'f32[4,128]{1,0:T(4,128)}', space=vmem, size = 0x800, scoped, tag = 'scratch operand']
  #allocation4 [shape = 'f32[4,128]{1,0:T(4,128)}', space=vmem, size = 0x800, scoped, tag = 'scratch operand']
  %s0 = inlined_call_operand.hbm [shape: f32[4,256], index: 0, kind: input, shape index: {}]
  %s1 = inlined_call_operand.hbm [shape: f32[4,256], index: 1, kind: input, shape index: {}]
  %s2 = inlined_call_operand.vmem [shape: f32[2,4,1], index: 2, kind: output, shape index: {0}]
  %s3 = inlined_call_operand.vmem [shape: f32[2,4,1], index: 3, kind: output, shape index: {1}]
  %s4 = inlined_call_operand.vmem [shape: f32[2,4,1], index: 4, kind: output, shape index: {2}]
  %5 = xla_tuple %s2, %s3, %s4
  %s6 = sld [smem:[#allocation0]]
  $region73: #{tpu_custom_call.1} parent=0
    _
  %s8 = ssub.s32 1, %s6
  %s9 = scalar_select 0, %s8, %s6
  $region1: #{tpu_custom_call.1} parent=0
    #allocation5 [shape = 'u8[4096]{0}', space=vmem, size = 0x1000, scoped, tag = 'input window, operand 0']
    #allocation6 [shape = 's32[2]{0}', space=sflag, size = 0x8, scoped, tag = 'scoped memory for tpu_custom_call.1']
    #allocation7 [shape = 'u8[4096]{0}', space=vmem, size = 0x1000, scoped, tag = 'input window, operand 1']
    #allocation8 [shape = 's32[2]{0}', space=sflag, size = 0x8, scoped, tag = 'scoped memory for tpu_custom_call.1']
    %10 = vsyncpa [#allocation6], 0
    %s11 = scalar_lea.sflag [#allocation6], 1
    %12 = vsyncpa %s11, 0
    %13 = vsyncpa [#allocation8], 0
    %s14 = scalar_lea.sflag [#allocation8], 1
    %15 = vsyncpa %s14, 0
    loop: start=0, step=1, limit=4
    $region2: #{tpu_custom_call.1} parent=1 // loop_pre_header
      _
    $region3: #{tpu_custom_call.1} parent=1 // loop_header
      %s17 = sphi 0, %s21
      %p18 = scmp.ge.s32.totalorder %s17, 4
      %s24 = sphi 0, %s36
      %s25 = sphi 0, %s32
      %s26 = sphi 0, %s24
      %s27 = sphi 0, %s25
      %s28 = sphi 0, %s26
      %s29 = sphi 0, %s27
      %s41 = sphi 0, %s43
      %s44 = sphi 0, %s41
      %s45 = sphi 0, %s44
      %s61 = sphi 0, %s45
      %s69 = sphi 0, %s71
      %s72 = sphi 0, %s69
      %s73 = sphi 0, %s72
      %s89 = sphi 0, %s73
      %s95 = sphi 0, %s97
      %s98 = sphi 0, %s95
      %s99 = sphi 0, %s98
      %s115 = sphi 0, %s99
      %s121 = sphi 0, %s123
      %s124 = sphi 0, %s121
      %s125 = sphi 0, %s124
      %s141 = sphi 0, %s125
      %s147 = sphi 0, %s149
      %s150 = sphi 0, %s147
      %s151 = sphi 0, %s150
      %s167 = sphi 0, %s151
    $region4: #{tpu_custom_call.1} parent=1 // loop_header_branch
      %20 = sbr.rel (%p18) target = $region8
    $region5: #{tpu_custom_call.1} parent=1 // loop_body
      %s22 = ssub.s32 %s17, 1
      %s23 = ssub.s32 %s17, 2
      %s30 = sadd.s32 1, %s25
      %p31 = scmp.ge.s32.totalorder %s30, 1
      %s32 = scalar_select %p31, 0, %s30
      %s33 = sadd.s32 1, %s24
      %s34 = scalar_select %p31, %s33, %s24
      %p35 = scmp.ge.s32.totalorder %s34, 2
      %s36 = scalar_select %p35, 0, %s34
      %s37 = sadd.s32 %s24, %s25
      %s38 = sadd.s32 %s36, %s32
      %s39 = ssub.s32 %s37, %s38
      %p40 = scmp.eq.s32.totalorder %s39, 0
      %s42 = sadd.s32 %s41, 1
      %s43 = scalar_select %p40, %s41, %s42
      %p46 = pneg %p40
      %p47 = scmp.eq.s32.totalorder %s17, 1
      %p48 = por %p46, %p47
      %p49 = scmp.ne.s32.totalorder %s41, %s44
      %p50 = scmp.eq.s32.totalorder %s17, 0
      %p51 = por %p49, %p50
      %p52 = scmp.ne.s32.totalorder %s41, %s44
      %p53 = scmp.eq.s32.totalorder %s22, 1
      %p54 = por %p52, %p53
      %p55 = scmp.ne.s32.totalorder %s44, %s45
      %p56 = scmp.eq.s32.totalorder %s22, 0
      %p57 = por %p55, %p56
      %p58 = scmp.ne.s32.totalorder %s44, %s45
      %p59 = scmp.eq.s32.totalorder %s23, 1
      %p60 = por %p58, %p59
      %p62 = scmp.ne.s32.totalorder %s45, %s61
      %p63 = scmp.eq.s32.totalorder %s23, 0
      %p64 = por %p62, %p63
      %s65 = sadd.s32 %s24, %s25
      %s66 = sadd.s32 %s36, %s32
      %s67 = ssub.s32 %s65, %s66
      %p68 = scmp.eq.s32.totalorder %s67, 0
      %s70 = sadd.s32 %s69, 1
      %s71 = scalar_select %p68, %s69, %s70
      %p74 = pneg %p68
      %p75 = scmp.eq.s32.totalorder %s17, 1
      %p76 = por %p74, %p75
      %p77 = scmp.ne.s32.totalorder %s69, %s72
      %p78 = scmp.eq.s32.totalorder %s17, 0
      %p79 = por %p77, %p78
      %p80 = scmp.ne.s32.totalorder %s69, %s72
      %p81 = scmp.eq.s32.totalorder %s22, 1
      %p82 = por %p80, %p81
      %p83 = scmp.ne.s32.totalorder %s72, %s73
      %p84 = scmp.eq.s32.totalorder %s22, 0
      %p85 = por %p83, %p84
      %p86 = scmp.ne.s32.totalorder %s72, %s73
      %p87 = scmp.eq.s32.totalorder %s23, 1
      %p88 = por %p86, %p87
      %p90 = scmp.ne.s32.totalorder %s73, %s89
      %p91 = scmp.eq.s32.totalorder %s23, 0
      %p92 = por %p90, %p91
      %s93 = ssub.s32 %s24, %s36
      %p94 = scmp.eq.s32.totalorder %s93, 0
      %s96 = sadd.s32 %s95, 1
      %s97 = scalar_select %p94, %s95, %s96
      %p100 = pneg %p94
      %p101 = scmp.eq.s32.totalorder %s17, 1
      %p102 = por %p100, %p101
      %p103 = scmp.ne.s32.totalorder %s95, %s98
      %p104 = scmp.eq.s32.totalorder %s17, 0
      %p105 = por %p103, %p104
      %p106 = scmp.ne.s32.totalorder %s95, %s98
      %p107 = scmp.eq.s32.totalorder %s22, 1
      %p108 = por %p106, %p107
      %p109 = scmp.ne.s32.totalorder %s98, %s99
      %p110 = scmp.eq.s32.totalorder %s22, 0
      %p111 = por %p109, %p110
      %p112 = scmp.ne.s32.totalorder %s98, %s99
      %p113 = scmp.eq.s32.totalorder %s23, 1
      %p114 = por %p112, %p113
      %p116 = scmp.ne.s32.totalorder %s99, %s115
      %p117 = scmp.eq.s32.totalorder %s23, 0
      %p118 = por %p116, %p117
      %s119 = ssub.s32 %s24, %s36
      %p120 = scmp.eq.s32.totalorder %s119, 0
      %s122 = sadd.s32 %s121, 1
      %s123 = scalar_select %p120, %s121, %s122
      %p126 = pneg %p120
      %p127 = scmp.eq.s32.totalorder %s17, 1
      %p128 = por %p126, %p127
      %p129 = scmp.ne.s32.totalorder %s121, %s124
      %p130 = scmp.eq.s32.totalorder %s17, 0
      %p131 = por %p129, %p130
      %p132 = scmp.ne.s32.totalorder %s121, %s124
      %p133 = scmp.eq.s32.totalorder %s22, 1
      %p134 = por %p132, %p133
      %p135 = scmp.ne.s32.totalorder %s124, %s125
      %p136 = scmp.eq.s32.totalorder %s22, 0
      %p137 = por %p135, %p136
      %p138 = scmp.ne.s32.totalorder %s124, %s125
      %p139 = scmp.eq.s32.totalorder %s23, 1
      %p140 = por %p138, %p139
      %p142 = scmp.ne.s32.totalorder %s125, %s141
      %p143 = scmp.eq.s32.totalorder %s23, 0
      %p144 = por %p142, %p143
      %s145 = ssub.s32 %s24, %s36
      %p146 = scmp.eq.s32.totalorder %s145, 0
      %s148 = sadd.s32 %s147, 1
      %s149 = scalar_select %p146, %s147, %s148
      %p152 = pneg %p146
      %p153 = scmp.eq.s32.totalorder %s17, 1
      %p154 = por %p152, %p153
      %p155 = scmp.ne.s32.totalorder %s147, %s150
      %p156 = scmp.eq.s32.totalorder %s17, 0
      %p157 = por %p155, %p156
      %p158 = scmp.ne.s32.totalorder %s147, %s150
      %p159 = scmp.eq.s32.totalorder %s22, 1
      %p160 = por %p158, %p159
      %p161 = scmp.ne.s32.totalorder %s150, %s151
      %p162 = scmp.eq.s32.totalorder %s22, 0
      %p163 = por %p161, %p162
      %p164 = scmp.ne.s32.totalorder %s150, %s151
      %p165 = scmp.eq.s32.totalorder %s23, 1
      %p166 = por %p164, %p165
      %p168 = scmp.ne.s32.totalorder %s151, %s167
      %p169 = scmp.eq.s32.totalorder %s23, 0
      %p170 = por %p168, %p169
      %p171 = scmp.le.s32.totalorder 1, %s17
      %p172 = scmp.lt.s32.totalorder %s17, 3
      %p173 = pnand %p171, %p172
      %p174 = pneg %p173
      // Predicated region
      $region9: #{tpu_custom_call.1} parent=5 // pred_check
        _
      $region10: #{tpu_custom_call.1} parent=5 // pred_check_branch
        %176 = sbr.rel (%p173) target = $region12
      $region11: #{tpu_custom_call.1} parent=5 // pred_region
        %s177 = ssub.s32 %s17, 1
      $region12: #{tpu_custom_call.1} parent=5 // pred_fallthru
        _
      %p178 = scmp.lt.s32.totalorder %s17, 2
      // Predicated region
      $region13: #{tpu_custom_call.1} parent=5 // pred_check
        %p179 = pneg %p178
      $region14: #{tpu_custom_call.1} parent=5 // pred_check_branch
        %181 = sbr.rel (%p179) target = $region16
      $region15: #{tpu_custom_call.1} parent=5 // pred_region
        // Predicated region
        $region17: #{tpu_custom_call.1} parent=15 // pred_check
          %p182 = pneg %p51
        $region18: #{tpu_custom_call.1} parent=15 // pred_check_branch
          %184 = sbr.rel (%p182) target = $region20
        $region19: #{tpu_custom_call.1} parent=15 // pred_region
          %s185 = sand.u32 %s41, 1
          %s186 = scalar_lea.sflag [#allocation6], %s185
          %s187 = sand.u32 %s41, 1
          %s188 = smul.addr %s187, 4
          %s189 = scalar_lea.vmem [#allocation5], %s188
          %s190 = sadd.s32 %s24, %s25
          %s192 = ssub.s32 64, 64
          %193 = vsyncadd %s186, %s192
          %s194 = smul.addr %s190, 64
          %s195 = scalar_lea.hbm %s0, %s194
          %s197 = sshll.u32 %s189, 4
          %s198 = int_to_ptr.vmem [resolvable:$true] %s197
          %200 = dma.hbm_to_vmem [thread:$0]  %s195, 64, %s198, %s186
        $region20: #{tpu_custom_call.1} parent=15 // pred_fallthru
          _
        // Predicated region
        $region21: #{tpu_custom_call.1} parent=15 // pred_check
          %p201 = pneg %p79
        $region22: #{tpu_custom_call.1} parent=15 // pred_check_branch
          %203 = sbr.rel (%p201) target = $region24
        $region23: #{tpu_custom_call.1} parent=15 // pred_region
          %s204 = sand.u32 %s69, 1
          %s205 = scalar_lea.sflag [#allocation8], %s204
          %s206 = sand.u32 %s69, 1
          %s207 = smul.addr %s206, 4
          %s208 = scalar_lea.vmem [#allocation7], %s207
          %s209 = sadd.s32 %s24, %s25
          %s211 = ssub.s32 64, 64
          %212 = vsyncadd %s205, %s211
          %s213 = smul.addr %s209, 64
          %s214 = scalar_lea.hbm %s1, %s213
          %s216 = sshll.u32 %s208, 4
          %s217 = int_to_ptr.vmem [resolvable:$true] %s216
          %219 = dma.hbm_to_vmem [thread:$0]  %s214, 64, %s217, %s205
        $region24: #{tpu_custom_call.1} parent=15 // pred_fallthru
          _
      $region16: #{tpu_custom_call.1} parent=5 // pred_fallthru
        _
      %p220 = scmp.le.s32.totalorder 1, %s17
      %p221 = scmp.lt.s32.totalorder %s17, 3
      %p222 = pnand %p220, %p221
      %p223 = pneg %p222
      // Predicated region
      $region25: #{tpu_custom_call.1} parent=5 // pred_check
        _
      $region26: #{tpu_custom_call.1} parent=5 // pred_check_branch
        %225 = sbr.rel (%p222) target = $region28
      $region27: #{tpu_custom_call.1} parent=5 // pred_region
        %s226 = ssub.s32 %s17, 1
        %s227 = sand.u32 %s44, 1
        %s228 = scalar_lea.sflag [#allocation6], %s227
        %s229 = sand.u32 %s44, 1
        %s230 = smul.addr %s229, 4
        %s231 = scalar_lea.vmem [#allocation5], %s230
        // Predicated region
        $region29: #{tpu_custom_call.1} parent=27 // pred_check
          %p232 = pneg %p57
        $region30: #{tpu_custom_call.1} parent=27 // pred_check_branch
          %234 = sbr.rel (%p232) target = $region32
        $region31: #{tpu_custom_call.1} parent=27 // pred_region
          %235 = dma.done %s228, 64
        $region32: #{tpu_custom_call.1} parent=27 // pred_fallthru
          _
        %s236 = sand.u32 %s72, 1
        %s237 = scalar_lea.sflag [#allocation8], %s236
        %s238 = sand.u32 %s72, 1
        %s239 = smul.addr %s238, 4
        %s240 = scalar_lea.vmem [#allocation7], %s239
        // Predicated region
        $region33: #{tpu_custom_call.1} parent=27 // pred_check
          %p241 = pneg %p85
        $region34: #{tpu_custom_call.1} parent=27 // pred_check_branch
          %243 = sbr.rel (%p241) target = $region36
        $region35: #{tpu_custom_call.1} parent=27 // pred_region
          %244 = dma.done %s237, 64
        $region36: #{tpu_custom_call.1} parent=27 // pred_fallthru
          _
        %s245 = sand.u32 %s44, 1
        %s246 = scalar_lea.sflag [#allocation6], %s245
        %s247 = sand.u32 %s44, 1
        %s248 = smul.addr %s247, 4
        %s249 = scalar_lea.vmem [#allocation5], %s248
        %p250 = pneg %p57
        %p251 = pneg %p54
        %s252 = sand.u32 %s72, 1
        %s253 = scalar_lea.sflag [#allocation8], %s252
        %s254 = sand.u32 %s72, 1
        %s255 = smul.addr %s254, 4
        %s256 = scalar_lea.vmem [#allocation7], %s255
        %p257 = pneg %p85
        %p258 = pneg %p82
        %p259 = pneg %p111
        %p260 = pneg %p108
        %p261 = scmp.lt.s32.totalorder %s26, 1
        %s262 = scalar_select %p261, %s26, 1
        %s263 = smul.addr %s262, 4
        %s264 = scalar_lea.vmem %s2, %s263
        %p265 = pneg %p137
        %p266 = pneg %p134
        %p267 = scmp.lt.s32.totalorder %s26, 1
        %s268 = scalar_select %p267, %s26, 1
        %s269 = smul.addr %s268, 4
        %s270 = scalar_lea.vmem %s3, %s269
        %p271 = pneg %p163
        %p272 = pneg %p160
        %p273 = scmp.lt.s32.totalorder %s26, 1
        %s274 = scalar_select %p273, %s26, 1
        %s275 = smul.addr %s274, 4
        %s276 = scalar_lea.vmem %s4, %s275
        %s277 = sadd.s32 %s26, %s27
        %s278 = sadd.s32 %s26, %s27
        %p279 = scmp.lt.s32.totalorder %s26, 1
        %s280 = scalar_select %p279, %s26, 1
        %s281 = smul.addr %s280, 4
        %s282 = scalar_lea.vmem %s2, %s281
        %p283 = scmp.lt.s32.totalorder %s26, 1
        %s284 = scalar_select %p283, %s26, 1
        %s285 = smul.addr %s284, 4
        %s286 = scalar_lea.vmem %s3, %s285
        %p287 = scmp.lt.s32.totalorder %s26, 1
        %s288 = scalar_select %p287, %s26, 1
        %s289 = smul.addr %s288, 4
        %s290 = scalar_lea.vmem %s4, %s289
        %p291 = scmp.eq.s32.totalorder %s27, 0
        // Predicated region
        $region37: #{tpu_custom_call.1} parent=27 // pred_check
          %p292 = pneg %p291
        $region38: #{tpu_custom_call.1} parent=27 // pred_check_branch
          %294 = sbr.rel (%p292) target = $region40
        $region39: #{tpu_custom_call.1} parent=27 // pred_region
          %295 = vst [vmem:[#allocation2] sm:$0xf] 0.0
          %296 = vst [vmem:[#allocation3] sm:$0xf] 0.0
          %297 = vst [vmem:[#allocation4] sm:$0xf] 0.0
        $region40: #{tpu_custom_call.1} parent=27 // pred_fallthru
          _
        %v298 = vld [vmem:[%s231] sm:$0xf]
        %v299 = vld [vmem:[%s240] sm:$0xf]
        %vm300 = vcmask 1043456
        %v301 = vsel %vm300, %v298, -inf
        %v302 = vrot.slane %v301, 4
        %v303 = vmax.f32 %v301, %v302
        %v304 = vrot.slane %v303, 2
        %v305 = vmax.f32 %v303, %v304
        %v306 = vrot.slane %v305, 1
        %v307 = vmax.f32 %v305, %v306
        %v308 = vsub.f32 %v298, %v307
        %v309 = vmul.f32 %v308, 1.442695
        %v310 = vpow.pop %v309
        %v311 = vsel %vm300, %v310, 0.0
        %v312 = vrot.slane %v311, 4
        %v313 = vadd.f32 %v311, %v312
        %v314 = vrot.slane %v313, 2
        %v315 = vadd.f32 %v313, %v314
        %v316 = vrot.slane %v315, 1
        %v317 = vadd.f32 %v315, %v316
        %v318 = vrcp.pop %v317
        %v319 = vmul.f32 %v310, %v318
        %v320 = vsub.f32 0.0, %v299
        %v321 = vmul.f32 %v320, 1.442695
        %v322 = vpow.pop %v321
        %v323 = vadd.f32 %v322, 1.0
        %v324 = vrcp.pop %v323
        %s325 = sadd.s32 %s26, %s27
        %s326 = smul.u32 %s325, 128
        %v327 = vlaneseq
        %v328 = vand.u32 %v327, 127
        %v329 = vstv %s326
        %v330 = vadd.s32 %v329, %v328
        %vm331 = vcmp.lt.s32.totalorder %v330, 16
        %v332 = vsel %vm331, %v319, 0.0
        %v333 = vsel %vm331, %v324, 0.0
        %v334 = vld [vmem:[#allocation2] sm:$0xf]
        %v335 = vmul.f32 %v332, %v333
        %v336 = vadd.f32 %v334, %v335
        %337 = vst [vmem:[#allocation2] sm:$0xf] %v336
        %v338 = vld [vmem:[#allocation3] sm:$0xf]
        %v339 = vadd.f32 %v338, %v333
        %340 = vst [vmem:[#allocation3] sm:$0xf] %v339
        %v341 = vld [vmem:[#allocation4] sm:$0xf]
        %v342 = vadd.f32 %v341, %v332
        %343 = vst [vmem:[#allocation4] sm:$0xf] %v342
        // Predicated region
        $region41: #{tpu_custom_call.1} parent=27 // pred_check
          %p344 = pneg %p291
        $region42: #{tpu_custom_call.1} parent=27 // pred_check_branch
          %346 = sbr.rel (%p344) target = $region44
        $region43: #{tpu_custom_call.1} parent=27 // pred_region
          %v347 = vld [vmem:[#allocation2] sm:$0xf]
          %v348 = vsel %vm300, %v347, 0.0
          %349 = vadd.xlane.f32.xlu0 %v348
          %v350 = vpop.xlane.xlu0 %349
          %vm351 = vcmask 3072
          %352 = vst.msk [vmem:[%s282] sm:$0xf] %vm351, %v350
          %v353 = vld [vmem:[#allocation3] sm:$0xf]
          %v354 = vsel %vm300, %v353, 0.0
          %355 = vadd.xlane.f32.xlu0 %v354
          %v356 = vpop.xlane.xlu0 %355
          %357 = vst.msk [vmem:[%s286] sm:$0xf] %vm351, %v356
          %v358 = vld [vmem:[#allocation4] sm:$0xf]
          %v359 = vsel %vm300, %v358, 0.0
          %360 = vadd.xlane.f32.xlu0 %v359
          %v361 = vpop.xlane.xlu0 %360
          %362 = vst.msk [vmem:[%s290] sm:$0xf] %vm351, %v361
        $region44: #{tpu_custom_call.1} parent=27 // pred_fallthru
          _
        %p363 = scmp.lt.s32.totalorder %s26, 1
        %s364 = scalar_select %p363, %s26, 1
        %s365 = smul.addr %s364, 4
        %s366 = scalar_lea.vmem %s2, %s365
        %p367 = scmp.lt.s32.totalorder %s26, 1
        %s368 = scalar_select %p367, %s26, 1
        %s369 = smul.addr %s368, 4
        %s370 = scalar_lea.vmem %s3, %s369
        %p371 = scmp.lt.s32.totalorder %s26, 1
        %s372 = scalar_select %p371, %s26, 1
        %s373 = smul.addr %s372, 4
        %s374 = scalar_lea.vmem %s4, %s373
        // Predicated region
        $region45: #{tpu_custom_call.1} parent=27 // pred_check
          %p375 = pneg %p108
        $region46: #{tpu_custom_call.1} parent=27 // pred_check_branch
          %377 = sbr.rel (%p375) target = $region48
        $region47: #{tpu_custom_call.1} parent=27 // pred_region
          _
        $region48: #{tpu_custom_call.1} parent=27 // pred_fallthru
          _
        // Predicated region
        $region49: #{tpu_custom_call.1} parent=27 // pred_check
          %p378 = pneg %p134
        $region50: #{tpu_custom_call.1} parent=27 // pred_check_branch
          %380 = sbr.rel (%p378) target = $region52
        $region51: #{tpu_custom_call.1} parent=27 // pred_region
          _
        $region52: #{tpu_custom_call.1} parent=27 // pred_fallthru
          _
        // Predicated region
        $region53: #{tpu_custom_call.1} parent=27 // pred_check
          %p381 = pneg %p160
        $region54: #{tpu_custom_call.1} parent=27 // pred_check_branch
          %383 = sbr.rel (%p381) target = $region56
        $region55: #{tpu_custom_call.1} parent=27 // pred_region
          _
        $region56: #{tpu_custom_call.1} parent=27 // pred_fallthru
          _
      $region28: #{tpu_custom_call.1} parent=5 // pred_fallthru
        _
      %p384 = scmp.le.s32.totalorder 2, %s17
      // Predicated region
      $region57: #{tpu_custom_call.1} parent=5 // pred_check
        %p385 = pneg %p384
      $region58: #{tpu_custom_call.1} parent=5 // pred_check_branch
        %387 = sbr.rel (%p385) target = $region60
      $region59: #{tpu_custom_call.1} parent=5 // pred_region
        %s388 = ssub.s32 %s17, 2
        // Predicated region
        $region61: #{tpu_custom_call.1} parent=59 // pred_check
          %p389 = pneg %p114
        $region62: #{tpu_custom_call.1} parent=59 // pred_check_branch
          %391 = sbr.rel (%p389) target = $region64
        $region63: #{tpu_custom_call.1} parent=59 // pred_region
          %p392 = scmp.lt.s32.totalorder %s28, 1
          %s393 = scalar_select %p392, %s28, 1
          %s394 = smul.addr %s393, 4
          %s395 = scalar_lea.vmem %s2, %s394
        $region64: #{tpu_custom_call.1} parent=59 // pred_fallthru
          _
        // Predicated region
        $region65: #{tpu_custom_call.1} parent=59 // pred_check
          %p396 = pneg %p140
        $region66: #{tpu_custom_call.1} parent=59 // pred_check_branch
          %398 = sbr.rel (%p396) target = $region68
        $region67: #{tpu_custom_call.1} parent=59 // pred_region
          %p399 = scmp.lt.s32.totalorder %s28, 1
          %s400 = scalar_select %p399, %s28, 1
          %s401 = smul.addr %s400, 4
          %s402 = scalar_lea.vmem %s3, %s401
        $region68: #{tpu_custom_call.1} parent=59 // pred_fallthru
          _
        // Predicated region
        $region69: #{tpu_custom_call.1} parent=59 // pred_check
          %p403 = pneg %p166
        $region70: #{tpu_custom_call.1} parent=59 // pred_check_branch
          %405 = sbr.rel (%p403) target = $region72
        $region71: #{tpu_custom_call.1} parent=59 // pred_region
          %p406 = scmp.lt.s32.totalorder %s28, 1
          %s407 = scalar_select %p406, %s28, 1
          %s408 = smul.addr %s407, 4
          %s409 = scalar_lea.vmem %s4, %s408
        $region72: #{tpu_custom_call.1} parent=59 // pred_fallthru
          _
      $region60: #{tpu_custom_call.1} parent=5 // pred_fallthru
        _
    $region6: #{tpu_custom_call.1} parent=1 // loop_footer
      %s21 = sadd.s32 1, %s17
    $region7: #{tpu_custom_call.1} parent=1 // loop_footer_branch
      %16 = sbr.rel target = $region3
    $region8: #{tpu_custom_call.1} parent=1 // loop_exit
      _
    %410 = vsyncpa [#allocation6], 1
    %s411 = scalar_lea.sflag [#allocation6], 1
    %412 = vsyncpa %s411, 1
    %413 = vsyncpa [#allocation8], 1
    %s414 = scalar_lea.sflag [#allocation8], 1
    %415 = vsyncpa %s414, 1

</llo_original>
